<compile_context>
chip_gen: v5e
topology: v5e:2x2
jax: 0.10.0
libtpu: 0.0.40
codegen_flags: <defaults>
</compile_context>

<pallas_src>
import functools

import jax
import jax.numpy as jnp
from jax.experimental import pallas as pl
from jax.experimental.pallas import tpu as pltpu

_LANE = 128  # TPU lane width; batch tiles must be a multiple of this.


def _classifier_kernel(x_ref, w1_ref, b1_ref, w2_ref, b2_ref, o_ref):
    """One batch tile (batch on lanes): relu(W1 @ x + b1) -> W2 @ h + b2."""
    x = x_ref[...]                                                   # (9,  TB) f32
    # Layer 1: (30, 9) @ (9, TB) -> (30, TB), bias broadcast over lanes.
    h = jnp.dot(w1_ref[...], x, preferred_element_type=jnp.float32)
    h = jnp.maximum(h + b1_ref[...], 0.0)                            # ReLU
    # Layer 2: (1, 30) @ (30, TB) -> (1, TB)
    y = jnp.dot(w2_ref[...], h, preferred_element_type=jnp.float32)
    o_ref[...] = (y + b2_ref[...]).astype(o_ref.dtype)               # .float() in torch


@functools.partial(jax.jit, static_argnames=("tile_b",))
def tracknet_v22_classifier_big(coord_features, params, *, tile_b=8192):
    """coord_features: (B, 9) float32 -> (B, 1) float32."""
    w1, b1, w2, b2 = params["w1"], params["b1"], params["w2"], params["b2"]
    B, F = coord_features.shape
    assert F == 9, f"expected 9 coord features, got {F}"

    # Effective batch tile: large (amortize per-step overhead), lane-multiple,
    # but never bigger than the (lane-rounded) batch so tiny inputs stay tiny.
    tile = max(_LANE, min(tile_b, pl.cdiv(B, _LANE) * _LANE))
    tile = pl.cdiv(tile, _LANE) * _LANE
    padded_b = pl.cdiv(B, tile) * tile

    # Lane-dense layout: batch on the last (lane) axis.
    x_t = coord_features.astype(jnp.float32).T                       # (9, B)
    if padded_b != B:
        x_t = jnp.pad(x_t, ((0, 0), (0, padded_b - B)))

    # Weights in PyTorch (out, in) layout; biases as columns for lane broadcast.
    w1m = w1.astype(jnp.float32)                                     # (30, 9)
    w2m = w2.astype(jnp.float32)                                     # (1, 30)
    b1c = b1.reshape(30, 1).astype(jnp.float32)                      # (30, 1)
    b2c = b2.reshape(1, 1).astype(jnp.float32)                       # (1, 1)

    grid = (padded_b // tile,)

    out = pl.pallas_call(
        _classifier_kernel,
        out_shape=jax.ShapeDtypeStruct((1, padded_b), jnp.float32),
        grid_spec=pl.GridSpec(
            grid=grid,
            in_specs=[
                # activations: tiled along the lane (batch) axis
                pl.BlockSpec((F, tile), lambda i: (0, i)),
                # weights / biases: full, resident blocks (constant index_map)
                pl.BlockSpec(w1m.shape, lambda i: (0, 0)),
                pl.BlockSpec(b1c.shape, lambda i: (0, 0)),
                pl.BlockSpec(w2m.shape, lambda i: (0, 0)),
                pl.BlockSpec(b2c.shape, lambda i: (0, 0)),
            ],
            out_specs=pl.BlockSpec((1, tile), lambda i: (0, i)),
        ),
        compiler_params=pltpu.CompilerParams(
            dimension_semantics=("parallel",),
            # Conservative across generations (v7x has 64 MiB physical VMEM);
            # with tile_b=8192 the working set is well under 2 MiB.
            vmem_limit_bytes=32 * 1024 * 1024,
        ),
    )(x_t, w1m, b1c, w2m, b2c)

    # Back to (B, 1), dropping the padded batch columns.
    return out[0, :B].reshape(B, 1)


def init_params(key):
    """Deterministic synthetic params in PyTorch nn.Linear (out, in) layout."""
    k1, k2, k3, k4 = jax.random.split(key, 4)
    bound1 = 1.0 / jnp.sqrt(9.0)
    bound2 = 1.0 / jnp.sqrt(30.0)
    return {
        "w1": jax.random.uniform(k1, (30, 9), jnp.float32, -bound1, bound1),
        "b1": jax.random.uniform(k2, (30,), jnp.float32, -bound1, bound1),
        "w2": jax.random.uniform(k3, (1, 30), jnp.float32, -bound2, bound2),
        "b2": jax.random.uniform(k4, (1,), jnp.float32, -bound2, bound2),
    }


def reference(coord_features, params):
    h = jnp.maximum(coord_features @ params["w1"].T + params["b1"], 0.0)
    return (h @ params["w2"].T + params["b2"]).astype(jnp.float32)


if __name__ == "__main__":
    key = jax.random.PRNGKey(0)
    kx, kx2, kp = jax.random.split(key, 3)
    params = init_params(kp)

    # Small batch (single grid step after lane padding).
    B = 8
    coord_features = jax.random.normal(kx, (B, 9), dtype=jnp.float32)
    out = jax.block_until_ready(tracknet_v22_classifier_big(coord_features, params))
    ref = reference(coord_features, params)
    assert out.shape == (B, 1), out.shape
    assert out.dtype == jnp.float32, out.dtype
    assert jnp.allclose(out, ref, atol=1e-5, rtol=1e-5)

    # Slightly larger batch with a small forced tile to exercise a multi-step grid.
    B2 = 300
    coord_features2 = jax.random.normal(kx2, (B2, 9), dtype=jnp.float32)
    out2 = jax.block_until_ready(
        tracknet_v22_classifier_big(coord_features2, params, tile_b=128))
    ref2 = reference(coord_features2, params)
    assert out2.shape == (B2, 1), out2.shape
    assert jnp.allclose(out2, ref2, atol=1e-5, rtol=1e-5)

    print("KERNEL_OK")
</pallas_src>

<mosaic_0001>
module attributes {stable_mosaic.version = 11 : i64} {
  func.func @_classifier_kernel(%arg0: i32, %arg1: memref<9x128xf32, #tpu.memory_space<vmem>>, %arg2: memref<30x9xf32, #tpu.memory_space<vmem>>, %arg3: memref<30x1xf32, #tpu.memory_space<vmem>>, %arg4: memref<1x30xf32, #tpu.memory_space<vmem>>, %arg5: memref<1x1xf32, #tpu.memory_space<vmem>>, %arg6: memref<1x128xf32, #tpu.memory_space<vmem>>) attributes {dimension_semantics = [#tpu.dimension_semantics<parallel>], iteration_bounds = array<i64: 1>, scalar_prefetch = 0 : i64, scratch_operands = 0 : i64, tpu.core_type = #tpu.core_type<tc>, window_params = [{transform_indices = @transform_0, window_bounds = array<i64: 9, 128>}, {pipeline_mode = #tpu.pipeline_mode<synchronous>, transform_indices = @transform_1, window_bounds = array<i64: 30, 9>}, {pipeline_mode = #tpu.pipeline_mode<synchronous>, transform_indices = @transform_2, window_bounds = array<i64: 30, 1>}, {pipeline_mode = #tpu.pipeline_mode<synchronous>, transform_indices = @transform_3, window_bounds = array<i64: 1, 30>}, {pipeline_mode = #tpu.pipeline_mode<synchronous>, transform_indices = @transform_4, window_bounds = array<i64: 1, 1>}, {transform_indices = @transform_5, window_bounds = array<i64: 1, 128>}]} {
    %c0 = arith.constant 0 : index
    %c0_0 = arith.constant 0 : index
    %0 = vector.load %arg1[%c0, %c0_0] : memref<9x128xf32, #tpu.memory_space<vmem>>, vector<9x128xf32>
    %c0_1 = arith.constant 0 : index
    %c0_2 = arith.constant 0 : index
    %1 = vector.load %arg2[%c0_1, %c0_2] : memref<30x9xf32, #tpu.memory_space<vmem>>, vector<30x9xf32>
    %cst = arith.constant dense<0.000000e+00> : vector<30x128xf32>
    %2 = tpu.matmul %1, %0, %cst {dimension_numbers = #tpu.dot_dimension_numbers<[1], [0], [0], [1], [0, 0, 1, 1], [], []>} : vector<30x9xf32>, vector<9x128xf32>, vector<30x128xf32> -> vector<30x128xf32>
    %c0_3 = arith.constant 0 : index
    %c0_4 = arith.constant 0 : index
    %3 = vector.load %arg3[%c0_3, %c0_4] : memref<30x1xf32, #tpu.memory_space<vmem>>, vector<30x1xf32>
    %4 = vector.broadcast %3 : vector<30x1xf32> to vector<30x128xf32>
    %5 = arith.addf %2, %4 : vector<30x128xf32>
    %cst_5 = arith.constant 0.000000e+00 : f32
    %6 = vector.broadcast %cst_5 : f32 to vector<30x128xf32>
    %7 = arith.maximumf %5, %6 : vector<30x128xf32>
    %c0_6 = arith.constant 0 : index
    %c0_7 = arith.constant 0 : index
    %8 = vector.load %arg4[%c0_6, %c0_7] : memref<1x30xf32, #tpu.memory_space<vmem>>, vector<1x30xf32>
    %cst_8 = arith.constant dense<0.000000e+00> : vector<1x128xf32>
    %9 = tpu.matmul %8, %7, %cst_8 {dimension_numbers = #tpu.dot_dimension_numbers<[1], [0], [0], [1], [0, 0, 1, 1], [], []>} : vector<1x30xf32>, vector<30x128xf32>, vector<1x128xf32> -> vector<1x128xf32>
    %c0_9 = arith.constant 0 : index
    %c0_10 = arith.constant 0 : index
    %10 = vector.load %arg5[%c0_9, %c0_10] : memref<1x1xf32, #tpu.memory_space<vmem>>, vector<1x1xf32>
    %11 = vector.broadcast %10 : vector<1x1xf32> to vector<1x128xf32>
    %12 = arith.addf %9, %11 : vector<1x128xf32>
    %c0_11 = arith.constant 0 : index
    %c0_12 = arith.constant 0 : index
    %13 = vector.load %arg6[%c0_11, %c0_12] : memref<1x128xf32, #tpu.memory_space<vmem>>, vector<1x128xf32>
    tpu.vector_store %arg6[%c0_11, %c0_12], %12 {strides = array<i32>} : memref<1x128xf32, #tpu.memory_space<vmem>>, vector<1x128xf32>,
    return
  }
  func.func @transform_0(%arg0: i32) -> (i32, i32) {
    %c0_i32 = arith.constant 0 : i32
    %c0_i32_0 = arith.constant 0 : i32
    return %c0_i32, %arg0 : i32, i32
  }
  func.func @transform_1(%arg0: i32) -> (i32, i32) {
    %c0_i32 = arith.constant 0 : i32
    %c0_i32_0 = arith.constant 0 : i32
    %c0_i32_1 = arith.constant 0 : i32
    return %c0_i32, %c0_i32_0 : i32, i32
  }
  func.func @transform_2(%arg0: i32) -> (i32, i32) {
    %c0_i32 = arith.constant 0 : i32
    %c0_i32_0 = arith.constant 0 : i32
    %c0_i32_1 = arith.constant 0 : i32
    return %c0_i32, %c0_i32_0 : i32, i32
  }
  func.func @transform_3(%arg0: i32) -> (i32, i32) {
    %c0_i32 = arith.constant 0 : i32
    %c0_i32_0 = arith.constant 0 : i32
    %c0_i32_1 = arith.constant 0 : i32
    return %c0_i32, %c0_i32_0 : i32, i32
  }
  func.func @transform_4(%arg0: i32) -> (i32, i32) {
    %c0_i32 = arith.constant 0 : i32
    %c0_i32_0 = arith.constant 0 : i32
    %c0_i32_1 = arith.constant 0 : i32
    return %c0_i32, %c0_i32_0 : i32, i32
  }
  func.func @transform_5(%arg0: i32) -> (i32, i32) {
    %c0_i32 = arith.constant 0 : i32
    %c0_i32_0 = arith.constant 0 : i32
    return %c0_i32, %arg0 : i32, i32
  }
}

</mosaic_0001>

<llo_original>
// kernel: tracknet_v22_classifier_big.1
$region0: #{tracknet_v22_classifier_big.1}
  #allocation0 [shape = 'u32[]', space=smem, size = 0x4, offset = 0x4, fixed_abs, tag = 'smem constant byte address 0x4 - core index']
  #allocation1 [shape = 'u32[72,128]{1,0:T(1,128)}', space=vmem, size = 0x9000, scoped, tag = 'internal scratch']
  #allocation2 [shape = 'f32[1,1]{1,0:T(1,128)S(1)}', space=vmem, size = 0x200, scoped, tag = 'scoped memory for tracknet_v22_classifier_big.1']
  %s0 = inlined_call_operand.vmem [shape: f32[9,128], index: 0, kind: input, shape index: {}]
  %s1 = inlined_call_operand.vmem [shape: f32[30,9], index: 1, kind: input, shape index: {}]
  %s2 = inlined_call_operand.vmem [shape: f32[30,1], index: 2, kind: input, shape index: {}]
  %s3 = inlined_call_operand.vmem [shape: f32[1,30], index: 3, kind: input, shape index: {}]
  %s4 = inlined_call_operand.<no memory space> [shape: f32[1,1], index: 4, kind: input, shape index: {}]
  %s5 = inlined_call_operand.vmem [shape: f32[1,128], index: 5, kind: output, shape index: {}]
  %s6 = sld [smem:[#allocation0]]
  $region30: #{tracknet_v22_classifier_big.1} parent=0
    _
  %s8 = ssub.s32 1, %s6
  %s9 = scalar_select 0, %s8, %s6
  %v10 = vstv %s4
  %11 = vst [vmem:[#allocation2] sm:$0x1] %v10
  // Predicated region
  $region2: #{tracknet_v22_classifier_big.1} parent=0 // pred_check
    _
  $region3: #{tracknet_v22_classifier_big.1} parent=0 // pred_check_branch
    %13 = sbr.rel (0) target = $region5
  $region4: #{tracknet_v22_classifier_big.1} parent=0 // pred_region
    _
  $region5: #{tracknet_v22_classifier_big.1} parent=0 // pred_fallthru
    _
  // Predicated region
  $region6: #{tracknet_v22_classifier_big.1} parent=0 // pred_check
    _
  $region7: #{tracknet_v22_classifier_big.1} parent=0 // pred_check_branch
    %15 = sbr.rel (0) target = $region9
  $region8: #{tracknet_v22_classifier_big.1} parent=0 // pred_region
    _
  $region9: #{tracknet_v22_classifier_big.1} parent=0 // pred_fallthru
    _
  // Predicated region
  $region10: #{tracknet_v22_classifier_big.1} parent=0 // pred_check
    _
  $region11: #{tracknet_v22_classifier_big.1} parent=0 // pred_check_branch
    %17 = sbr.rel (0) target = $region13
  $region12: #{tracknet_v22_classifier_big.1} parent=0 // pred_region
    _
  $region13: #{tracknet_v22_classifier_big.1} parent=0 // pred_fallthru
    _
  // Predicated region
  $region14: #{tracknet_v22_classifier_big.1} parent=0 // pred_check
    _
  $region15: #{tracknet_v22_classifier_big.1} parent=0 // pred_check_branch
    %19 = sbr.rel (0) target = $region17
  $region16: #{tracknet_v22_classifier_big.1} parent=0 // pred_region
    _
  $region17: #{tracknet_v22_classifier_big.1} parent=0 // pred_fallthru
    _
  // Predicated region
  $region18: #{tracknet_v22_classifier_big.1} parent=0 // pred_check
    _
  $region19: #{tracknet_v22_classifier_big.1} parent=0 // pred_check_branch
    %21 = sbr.rel (0) target = $region21
  $region20: #{tracknet_v22_classifier_big.1} parent=0 // pred_region
    _
  $region21: #{tracknet_v22_classifier_big.1} parent=0 // pred_fallthru
    _
  %v22 = vld [vmem:[%s0] sm:$0xff]
  %v23 = vld [vmem:[%s0 + $0x8] sm:$0x1]
  %v24 = vld [vmem:[%s1] sm:$0xff]
  %v25 = vld [vmem:[%s1 + $0x8] sm:$0xff]
  %v26 = vld [vmem:[%s1 + $0x10] sm:$0xff]
  %v27 = vld [vmem:[%s1 + $0x18] sm:$0x3f]
  %v28 = vld [vmem:[%s2] sm:$0xff]
  %v29 = vld [vmem:[%s2 + $0x8] sm:$0xff]
  %v30 = vld [vmem:[%s2 + $0x10] sm:$0xff]
  %v31 = vld [vmem:[%s2 + $0x18] sm:$0x3f]
  %33 = vset.pattern.permute.xlu0 0
  %34 = vperm.xlu0 %33, %v28
  %v35 = vpop.permute.xlu0 %34
  %38 = vset.pattern.permute.xlu0 0
  %39 = vperm.xlu0 %38, %v29
  %v40 = vpop.permute.xlu0 %39
  %43 = vset.pattern.permute.xlu0 0
  %44 = vperm.xlu0 %43, %v30
  %v45 = vpop.permute.xlu0 %44
  %48 = vset.pattern.permute.xlu0 0
  %49 = vperm.xlu0 %48, %v31
  %v50 = vpop.permute.xlu0 %49
  %vm52 = vcmask 72704
  %v54 = vsel %vm52, %v24, 0
  %v57 = vsel %vm52, %v25, 0
  %v60 = vsel %vm52, %v26, 0
  %v63 = vsel %vm52, %v27, 0
  %vm65 = vcmask 1040384
  %v67 = vsel %vm65, %v23, 0
  %69 = vmatpush.msra.mxu0 0.0
  %70 = vmatpush.msra.mxu0 0.0
  %71 = vmatpush.msra.mxu0 0.0
  %72 = vmatpush.msra.mxu0 0.0
  %73 = vmatpush.msra.mxu0 0.0
  %74 = vmatpush.msra.mxu0 0.0
  %75 = vmatpush.msra.mxu0 0.0
  %76 = vmatpush.msra.mxu0 0.0
  %77 = vmatpush.msra.mxu0 0.0
  %78 = vmatpush.msra.mxu0 0.0
  %79 = vmatpush.msra.mxu0 0.0
  %80 = vmatpush.msra.mxu0 0.0
  %81 = vmatpush.msra.mxu0 0.0
  %82 = vmatpush.msra.mxu0 0.0
  %83 = vmatpush.msra.mxu0 %v67
  %84 = vmatpush.msra.mxu0 %v22
  %85 = vmatmul.f32.gmra.mxu0 %v54
  %v86 = vpop.f32.mrf.mxu0
  %v87 = vadd.f32 %v35, %v86
  %88 = vmatmul.f32.gmra.mxu0 %v57
  %v89 = vpop.f32.mrf.mxu0
  %v90 = vadd.f32 %v40, %v89
  %91 = vmatmul.f32.gmra.mxu0 %v60
  %v92 = vpop.f32.mrf.mxu0
  %v93 = vadd.f32 %v45, %v92
  %94 = vmatmul.f32.gmra.mxu0 %v63
  %v95 = vpop.f32.mrf.mxu0
  %v96 = vadd.f32 %v50, %v95
  %97 = vdwg.mxu0
  %v98 = vmax.f32 %v87, 0.0
  %v99 = vmax.f32 %v90, 0.0
  %v100 = vmax.f32 %v93, 0.0
  %v101 = vmax.f32 %v96, 0.0
  %v102 = vld [vmem:[%s3] sm:$0x1]
  %v103 = vld [vmem:[#allocation2] sm:$0x1]
  %105 = vset.pattern.permute.xlu0 0
  %106 = vperm.xlu0 %105, %v103
  %v107 = vpop.permute.xlu0 %106
  %v109 = vperm.slane %v107, 0
  %vm110 = vcmask 244736
  %v112 = vsel %vm110, %v102, 0
  %vm114 = vcmask 1045504
  %v116 = vsel %vm114, %v101, 0
  %118 = vmatpush.msra.mxu0 0.0
  %119 = vmatpush.msra.mxu0 0.0
  %120 = vmatpush.msra.mxu0 0.0
  %121 = vmatpush.msra.mxu0 0.0
  %122 = vmatpush.msra.mxu0 0.0
  %123 = vmatpush.msra.mxu0 0.0
  %124 = vmatpush.msra.mxu0 0.0
  %125 = vmatpush.msra.mxu0 0.0
  %126 = vmatpush.msra.mxu0 0.0
  %127 = vmatpush.msra.mxu0 0.0
  %128 = vmatpush.msra.mxu0 0.0
  %129 = vmatpush.msra.mxu0 0.0
  %130 = vmatpush.msra.mxu0 %v116
  %131 = vmatpush.msra.mxu0 %v100
  %132 = vmatpush.msra.mxu0 %v99
  %133 = vmatpush.msra.mxu0 %v98
  %134 = vmatmul.f32.gmra.mxu0 %v112
  %v135 = vpop.f32.mrf.mxu0
  %v136 = vadd.f32 %v109, %v135
  %137 = vdwg.mxu0
  %138 = vst [vmem:[%s5] sm:$0x1] %v136
  // Predicated region
  $region22: #{tracknet_v22_classifier_big.1} parent=0 // pred_check
    _
  $region23: #{tracknet_v22_classifier_big.1} parent=0 // pred_check_branch
    %140 = sbr.rel (0) target = $region25
  $region24: #{tracknet_v22_classifier_big.1} parent=0 // pred_region
    _
  $region25: #{tracknet_v22_classifier_big.1} parent=0 // pred_fallthru
    _
  // Predicated region
  $region26: #{tracknet_v22_classifier_big.1} parent=0 // pred_check
    _
  $region27: #{tracknet_v22_classifier_big.1} parent=0 // pred_check_branch
    %142 = sbr.rel (0) target = $region29
  $region28: #{tracknet_v22_classifier_big.1} parent=0 // pred_region
    _
  $region29: #{tracknet_v22_classifier_big.1} parent=0 // pred_fallthru
    _

</llo_original>
